<compile_context>
chip_gen: v7x
topology: tpu7x:2x2x1
jax: 0.10.0
libtpu: 0.0.40
codegen_flags: <defaults>
</compile_context>

<pallas_src>
import functools

import jax
import jax.numpy as jnp
from jax.experimental import pallas as pl
from jax.experimental.pallas import tpu as pltpu

LANES = 128
_TARGET_BLOCK_BYTES = 4 << 20     # ~4 MiB per input block per grid step
_VMEM_LIMIT_BYTES = 48 << 20      # 2 in x 2 bufs x 4 MiB + temps; < v7x 64 MiB physical


def _sublane_multiple(dtype):
    # min second-to-last tile dim: 8 for 4-byte dtypes, 16 for 2-byte (bf16)
    return 16 if jnp.dtype(dtype).itemsize == 2 else 8


def _num_tensorcores():
    # 2-way megacore split only where it helps (v7x has 2 TensorCores/chip).
    # TODO(synk): switch to pltpu.get_tpu_info() once a core-count field is exposed.
    try:
        kind = jax.devices()[0].device_kind.lower()
    except Exception:
        return 1
    return 2 if "v7" in kind else 1


def _mape_kernel(rows_ref, yhat_ref, y_ref, out_ref, *, tile_rows, tiles_per_core):
    """Accumulate a lane-parallel (8,128) partial sum of |(y-yhat)/y| per core."""
    c = pl.program_id(0)          # parallel (megacore) axis
    i = pl.program_id(1)          # sequential reduction axis

    @pl.when(i == 0)
    def _():
        out_ref[...] = jnp.zeros_like(out_ref)

    n_rows = rows_ref[0]                        # true (unpadded) row count
    row0 = (c * tiles_per_core + i) * tile_rows

    def _accumulate(mask_rows):
        y = y_ref[...].astype(jnp.float32)
        yhat = yhat_ref[...].astype(jnp.float32)
        # Exact divide on purpose: approx reciprocal (~2^-12 rel err) may break
        # the 1e-5 tolerance vs the torch reference.
        ape = jnp.abs((y - yhat) / y)           # y == 0 -> inf/nan (torch-compatible)
        if mask_rows:
            rows = jax.lax.broadcasted_iota(jnp.int32, (tile_rows, LANES), 0) + row0
            ape = jnp.where(rows < n_rows, ape, 0.0)   # select drops masked inf/nan
        # Fold (tile_rows,128) -> (8,128) with pure VPU vreg adds; the single
        # expensive cross-lane reduce is deferred to the JAX wrapper.
        out_ref[...] += jnp.sum(ape.reshape(tile_rows // 8, 8, LANES), axis=0)

    # Fast path: tile fully in range -> no iota / compare / select work.
    @pl.when(row0 + tile_rows <= n_rows)
    def _():
        _accumulate(mask_rows=False)

    # Slow path: only the final partial tile pays for the row mask.  Tiles that
    # are entirely out of range (clamped duplicate on an odd megacore split)
    # skip compute altogether.
    @pl.when(jnp.logical_and(row0 < n_rows, row0 + tile_rows > n_rows))
    def _():
        _accumulate(mask_rows=True)


def mape(yhat, y):
    """MAPE of yhat vs y, matching torch.mean(torch.abs((y - yhat) / y)) * 100."""
    assert yhat.shape == y.shape, (yhat.shape, y.shape)
    n_true = int(yhat.size)
    assert n_true > 0

    # Stream bf16 natively (upcast to f32 inside the kernel -> halves HBM
    # traffic); everything else is promoted to f32.
    dtype = jnp.promote_types(yhat.dtype, y.dtype)
    if jnp.dtype(dtype) != jnp.dtype(jnp.bfloat16):
        dtype = jnp.float32
    yhat_flat = yhat.astype(dtype).reshape(-1)
    y_flat = y.astype(dtype).reshape(-1)

    n_rows = n_true // LANES                    # full 128-lane rows for the kernel
    tail_len = n_true - n_rows * LANES          # <128-element ragged lane tail

    # The tiny lane tail is summed in plain JAX, so the kernel only ever sees
    # full 128-wide rows and no full-array jnp.pad copy is required.
    if tail_len:
        ty = y_flat[n_rows * LANES:].astype(jnp.float32)
        tyh = yhat_flat[n_rows * LANES:].astype(jnp.float32)
        tail_sum = jnp.sum(jnp.abs((ty - tyh) / ty))
    else:
        tail_sum = jnp.zeros((), jnp.float32)

    if n_rows == 0:
        # Fewer than 128 elements: nothing 128-aligned for the kernel to stream.
        return (tail_sum * (100.0 / n_true)).astype(jnp.float32)

    sub = _sublane_multiple(dtype)
    if tail_len:
        # NOTE: XLA may still materialize this prefix slice, but it avoids the
        # pad write and aligned inputs remain fully zero-copy.
        # TODO(synk): a flat-index masked pl.ANY manual-DMA path would make the
        # ragged case zero-copy end to end.
        yhat_main = yhat_flat[: n_rows * LANES]
        y_main = y_flat[: n_rows * LANES]
    else:
        yhat_main = yhat_flat
        y_main = y_flat

    rows_arr = n_rows
    if rows_arr < sub:
        # Tiny inputs: pad up to one minimum sublane tile (<1024/2048 elements);
        # padded rows are dropped by the in-kernel row mask.
        pad_rows = sub - rows_arr
        yhat_main = jnp.pad(yhat_main, (0, pad_rows * LANES), constant_values=1)
        y_main = jnp.pad(y_main, (0, pad_rows * LANES), constant_values=1)
        rows_arr = sub
    yhat2 = yhat_main.reshape(rows_arr, LANES)
    y2 = y_main.reshape(rows_arr, LANES)

    # ~4 MiB per input block, rows a multiple of the min sublane tile, and never
    # larger than the array (the final block may be partial -> masked in-kernel).
    target_rows = _TARGET_BLOCK_BYTES // (LANES * jnp.dtype(dtype).itemsize)
    tile_rows = max(sub, min(int(target_rows), (rows_arr // sub) * sub))

    num_blocks = pl.cdiv(rows_arr, tile_rows)
    ncores = 2 if (num_blocks >= 2 and _num_tensorcores() == 2) else 1
    tiles_per_core = pl.cdiv(num_blocks, ncores)

    def in_map(c, i, rows_ref):
        # Clamp so an out-of-range tile (odd split on 2 cores) re-reads a valid
        # block; its compute is skipped in-kernel via pl.when.
        blk = jnp.minimum(c * tiles_per_core + i, num_blocks - 1)
        return (blk, 0)

    kernel = functools.partial(_mape_kernel, tile_rows=tile_rows,
                               tiles_per_core=tiles_per_core)

    partials = pl.pallas_call(
        kernel,
        out_shape=jax.ShapeDtypeStruct((ncores * 8, LANES), jnp.float32),
        grid_spec=pltpu.PrefetchScalarGridSpec(
            num_scalar_prefetch=1,              # true row count -> SMEM
            grid=(ncores, tiles_per_core),
            in_specs=[
                pl.BlockSpec((tile_rows, LANES), in_map),
                pl.BlockSpec((tile_rows, LANES), in_map),
            ],
            out_specs=pl.BlockSpec((8, LANES), lambda c, i, rows_ref: (c, 0)),
        ),
        compiler_params=pltpu.CompilerParams(
            dimension_semantics=("parallel", "arbitrary"),
            vmem_limit_bytes=_VMEM_LIMIT_BYTES,
        ),
    )(jnp.array([n_rows], dtype=jnp.int32), yhat2, y2)

    # Final cross-lane reduce + mean*100 on a tiny (ncores*8, 128) slab.
    total = jnp.sum(partials) + tail_sum
    return (total * (100.0 / n_true)).astype(jnp.float32)


if __name__ == "__main__":
    key = jax.random.PRNGKey(0)
    k1, k2 = jax.random.split(key)

    # small shapes consistent with an arbitrary-tensor metric, e.g. NCHW preds
    shape = (2, 4, 16, 16)
    y = jax.random.uniform(k1, shape, jnp.float32, minval=0.5, maxval=2.0)
    yhat = y + 0.1 * jax.random.normal(k2, shape, jnp.float32)

    result = mape(yhat, y)
    jax.block_until_ready(result)

    ref = jnp.mean(jnp.abs((y - yhat) / y)) * 100.0
    assert jnp.allclose(result, ref, rtol=1e-5, atol=1e-5), (result, ref)

    # also exercise the ragged (non-multiple-of-128) path: masked boundary tile
    # in the kernel + <128-element lane tail summed in the wrapper
    shape2 = (3, 5, 7, 11)  # 1155 elements
    y2 = jax.random.uniform(k1, shape2, jnp.float32, minval=0.5, maxval=2.0)
    yhat2 = y2 + 0.1 * jax.random.normal(k2, shape2, jnp.float32)
    r2 = mape(yhat2, y2)
    jax.block_until_ready(r2)
    ref2 = jnp.mean(jnp.abs((y2 - yhat2) / y2)) * 100.0
    assert jnp.allclose(r2, ref2, rtol=1e-5, atol=1e-5), (r2, ref2)

    print("KERNEL_OK")
</pallas_src>

<mosaic_0001>
module attributes {stable_mosaic.version = 11 : i64} {
  func.func @_mape_kernel(%arg0: i32, %arg1: i32, %arg2: memref<1xi32, #tpu.memory_space<smem>>, %arg3: memref<16x128xf32, #tpu.memory_space<vmem>>, %arg4: memref<16x128xf32, #tpu.memory_space<vmem>>, %arg5: memref<8x128xf32, #tpu.memory_space<vmem>>) attributes {dimension_semantics = [#tpu.dimension_semantics<parallel>, #tpu.dimension_semantics<arbitrary>], iteration_bounds = array<i64: 1, 1>, scalar_prefetch = 1 : i64, scratch_operands = 0 : i64, tpu.core_type = #tpu.core_type<tc>, window_params = [{transform_indices = @transform_0, window_bounds = array<i64: 16, 128>}, {transform_indices = @transform_1, window_bounds = array<i64: 16, 128>}, {transform_indices = @transform_2, window_bounds = array<i64: 8, 128>}]} {
    %c0_i32 = arith.constant 0 : i32
    %0 = arith.cmpi eq, %arg1, %c0_i32 : i32
    %1 = arith.extui %0 : i1 to i32
    %c0_i32_0 = arith.constant 0 : i32
    %2 = arith.cmpi ne, %1, %c0_i32_0 : i32
    scf.if %2 {
      %cst = arith.constant 0.000000e+00 : f32
      %17 = vector.broadcast %cst : f32 to vector<8x128xf32>
      %c0_5 = arith.constant 0 : index
      %c0_6 = arith.constant 0 : index
      %18 = vector.load %arg5[%c0_5, %c0_6] : memref<8x128xf32, #tpu.memory_space<vmem>>, vector<8x128xf32>
      tpu.vector_store %arg5[%c0_5, %c0_6], %17 {strides = array<i32>} : memref<8x128xf32, #tpu.memory_space<vmem>>, vector<8x128xf32>,
    } else {
    }
    %c0 = arith.constant 0 : index
    %3 = memref.load %arg2[%c0] : memref<1xi32, #tpu.memory_space<smem>>
    %c1_i32 = arith.constant 1 : i32
    %4 = arith.muli %arg0, %c1_i32 : i32
    %5 = arith.addi %4, %arg1 : i32
    %c16_i32 = arith.constant 16 : i32
    %6 = arith.muli %5, %c16_i32 : i32
    %c16_i32_1 = arith.constant 16 : i32
    %7 = arith.addi %6, %c16_i32_1 : i32
    %8 = arith.cmpi sle, %7, %3 : i32
    %9 = arith.extui %8 : i1 to i32
    %c0_i32_2 = arith.constant 0 : i32
    %10 = arith.cmpi ne, %9, %c0_i32_2 : i32
    scf.if %10 {
      %c0_5 = arith.constant 0 : index
      %c0_6 = arith.constant 0 : index
      %17 = vector.load %arg4[%c0_5, %c0_6] : memref<16x128xf32, #tpu.memory_space<vmem>>, vector<16x128xf32>
      %c0_7 = arith.constant 0 : index
      %c0_8 = arith.constant 0 : index
      %18 = vector.load %arg3[%c0_7, %c0_8] : memref<16x128xf32, #tpu.memory_space<vmem>>, vector<16x128xf32>
      %19 = arith.subf %17, %18 : vector<16x128xf32>
      %20 = arith.divf %19, %17 : vector<16x128xf32>
      %21 = math.absf %20 : vector<16x128xf32>
      %c0_9 = arith.constant 0 : index
      %c0_10 = arith.constant 0 : index
      %22 = vector.load %arg5[%c0_9, %c0_10] : memref<8x128xf32, #tpu.memory_space<vmem>>, vector<8x128xf32>
      %23 = vector.shape_cast %21 : vector<16x128xf32> to vector<2x8x128xf32>
      %cst = arith.constant dense<0.000000e+00> : vector<8x128xf32>
      %24 = vector.multi_reduction <add>, %23, %cst [0] : vector<2x8x128xf32> to vector<8x128xf32>
      %25 = arith.addf %22, %24 : vector<8x128xf32>
      %c0_11 = arith.constant 0 : index
      %c0_12 = arith.constant 0 : index
      %26 = vector.load %arg5[%c0_11, %c0_12] : memref<8x128xf32, #tpu.memory_space<vmem>>, vector<8x128xf32>
      tpu.vector_store %arg5[%c0_11, %c0_12], %25 {strides = array<i32>} : memref<8x128xf32, #tpu.memory_space<vmem>>, vector<8x128xf32>,
    } else {
    }
    %11 = arith.cmpi slt, %6, %3 : i32
    %c16_i32_3 = arith.constant 16 : i32
    %12 = arith.addi %6, %c16_i32_3 : i32
    %13 = arith.cmpi sgt, %12, %3 : i32
    %14 = arith.andi %11, %13 : i1
    %15 = arith.extui %14 : i1 to i32
    %c0_i32_4 = arith.constant 0 : i32
    %16 = arith.cmpi ne, %15, %c0_i32_4 : i32
    scf.if %16 {
      %c0_5 = arith.constant 0 : index
      %c0_6 = arith.constant 0 : index
      %17 = vector.load %arg4[%c0_5, %c0_6] : memref<16x128xf32, #tpu.memory_space<vmem>>, vector<16x128xf32>
      %c0_7 = arith.constant 0 : index
      %c0_8 = arith.constant 0 : index
      %18 = vector.load %arg3[%c0_7, %c0_8] : memref<16x128xf32, #tpu.memory_space<vmem>>, vector<16x128xf32>
      %19 = arith.subf %17, %18 : vector<16x128xf32>
      %20 = arith.divf %19, %17 : vector<16x128xf32>
      %21 = math.absf %20 : vector<16x128xf32>
      %22 = tpu.iota {dimensions = array<i32: 0>} : vector<16x128xi32>
      %23 = vector.broadcast %6 : i32 to vector<16x128xi32>
      %24 = arith.addi %22, %23 : vector<16x128xi32>
      %25 = vector.broadcast %3 : i32 to vector<16x128xi32>
      %26 = arith.cmpi slt, %24, %25 : vector<16x128xi32>
      %cst = arith.constant 0.000000e+00 : f32
      %27 = vector.broadcast %cst : f32 to vector<16x128xf32>
      %28 = arith.select %26, %21, %27 : vector<16x128xi1>, vector<16x128xf32>
      %c0_9 = arith.constant 0 : index
      %c0_10 = arith.constant 0 : index
      %29 = vector.load %arg5[%c0_9, %c0_10] : memref<8x128xf32, #tpu.memory_space<vmem>>, vector<8x128xf32>
      %30 = vector.shape_cast %28 : vector<16x128xf32> to vector<2x8x128xf32>
      %cst_11 = arith.constant dense<0.000000e+00> : vector<8x128xf32>
      %31 = vector.multi_reduction <add>, %30, %cst_11 [0] : vector<2x8x128xf32> to vector<8x128xf32>
      %32 = arith.addf %29, %31 : vector<8x128xf32>
      %c0_12 = arith.constant 0 : index
      %c0_13 = arith.constant 0 : index
      %33 = vector.load %arg5[%c0_12, %c0_13] : memref<8x128xf32, #tpu.memory_space<vmem>>, vector<8x128xf32>
      tpu.vector_store %arg5[%c0_12, %c0_13], %32 {strides = array<i32>} : memref<8x128xf32, #tpu.memory_space<vmem>>, vector<8x128xf32>,
    } else {
    }
    return
  }
  func.func @transform_0(%arg0: i32, %arg1: i32, %arg2: memref<1xi32, #tpu.memory_space<smem>>) -> (i32, i32) {
    %c1_i32 = arith.constant 1 : i32
    %0 = arith.muli %arg0, %c1_i32 : i32
    %1 = arith.addi %0, %arg1 : i32
    %c0_i32 = arith.constant 0 : i32
    %2 = arith.minsi %1, %c0_i32 : i32
    %c0_i32_0 = arith.constant 0 : i32
    %c0_i32_1 = arith.constant 0 : i32
    return %2, %c0_i32_0 : i32, i32
  }
  func.func @transform_1(%arg0: i32, %arg1: i32, %arg2: memref<1xi32, #tpu.memory_space<smem>>) -> (i32, i32) {
    %c1_i32 = arith.constant 1 : i32
    %0 = arith.muli %arg0, %c1_i32 : i32
    %1 = arith.addi %0, %arg1 : i32
    %c0_i32 = arith.constant 0 : i32
    %2 = arith.minsi %1, %c0_i32 : i32
    %c0_i32_0 = arith.constant 0 : i32
    %c0_i32_1 = arith.constant 0 : i32
    return %2, %c0_i32_0 : i32, i32
  }
  func.func @transform_2(%arg0: i32, %arg1: i32, %arg2: memref<1xi32, #tpu.memory_space<smem>>) -> (i32, i32) {
    %c0_i32 = arith.constant 0 : i32
    %c0_i32_0 = arith.constant 0 : i32
    return %arg0, %c0_i32 : i32, i32
  }
}

</mosaic_0001>

<llo_original>
// kernel: tpu_custom_call.1
$region0: #{tpu_custom_call.1}
  #allocation0 [shape = 'u32[]', space=smem, size = 0x4, offset = 0x4, fixed_abs, tag = 'smem constant byte address 0x4 - core index']
  #allocation1 [shape = 'u32[144,128]{1,0:T(1,128)}', space=vmem, size = 0x12000, scoped, tag = 'internal scratch']
  #allocation2 [shape = 's32[1]{0}', space=sflag, size = 0x4, scoped, tag = 'scoped memory for tpu_custom_call.1']
  #allocation3 [shape = 's32[1]{0:T(128)S(6)}', space=smem, size = 0x200, scoped, tag = 'prefetched SMEM operand 0']
  %s0 = inlined_call_operand.<no memory space> [shape: s32[1], index: 0, kind: input, shape index: {}]
  %s1 = inlined_call_operand.hbm [shape: f32[16,128], index: 1, kind: input, shape index: {}]
  %s2 = inlined_call_operand.hbm [shape: f32[16,128], index: 2, kind: input, shape index: {}]
  %s3 = inlined_call_operand.hbm [shape: f32[8,128], index: 3, kind: output, shape index: {}]
  %s4 = sld [smem:[#allocation0]]
  $region38: #{tpu_custom_call.1} parent=0
    _
  %s6 = ssub.s32 1, %s4
  %s7 = scalar_select 0, %s6, %s4
  %8 = sst [smem:[#allocation3]] %s0
  $region1: #{tpu_custom_call.1} parent=0
    #allocation4 [shape = 'u8[8192]{0}', space=vmem, size = 0x2000, scoped, tag = 'input window, operand 1, single buffered']
    #allocation5 [shape = 's32[1]{0}', space=sflag, size = 0x4, scoped, tag = 'scoped memory for tpu_custom_call.1']
    #allocation6 [shape = 's32[1]{0}', space=sflag, size = 0x4, scoped, tag = 'scoped memory for tpu_custom_call.1']
    #allocation7 [shape = 'u8[8192]{0}', space=vmem, size = 0x2000, scoped, tag = 'input window, operand 2, single buffered']
    #allocation8 [shape = 's32[1]{0}', space=sflag, size = 0x4, scoped, tag = 'scoped memory for tpu_custom_call.1']
    #allocation9 [shape = 'u8[4096]{0}', space=vmem, size = 0x1000, scoped, tag = 'output window, operand 0, single buffered']
    %9 = vsyncpa [#allocation5], 0
    %10 = vsyncpa [#allocation8], 0
    %11 = vsyncpa [#allocation6], 0
    // Predicated region
    $region2: #{tpu_custom_call.1} parent=1 // pred_check
      _
    $region3: #{tpu_custom_call.1} parent=1 // pred_check_branch
      %13 = sbr.rel (0) target = $region5
    $region4: #{tpu_custom_call.1} parent=1 // pred_region
      %s14 = sadd.s32 0, 0
      %p15 = scmp.lt.s32.totalorder %s14, 0
      %s16 = scalar_select %p15, %s14, 0
      %s17 = smul.u32 2, %s16
      %s19 = ssub.s32 256, 256
      %20 = vsyncadd [#allocation5], %s19
      %s21 = smul.addr %s17, 128
      %s22 = scalar_lea.hbm %s1, %s21
      %s23 = sshll.u32 [#allocation4], 4
      %s24 = int_to_ptr.vmem [resolvable:$true] %s23
      %29 = dma.hbm_to_vmem [thread:$0]  %s22, 256, %s24, [#allocation5], 128, 128, 8
    $region5: #{tpu_custom_call.1} parent=1 // pred_fallthru
      _
    // Predicated region
    $region6: #{tpu_custom_call.1} parent=1 // pred_check
      _
    $region7: #{tpu_custom_call.1} parent=1 // pred_check_branch
      %31 = sbr.rel (0) target = $region9
    $region8: #{tpu_custom_call.1} parent=1 // pred_region
      %s32 = sadd.s32 0, 0
      %p33 = scmp.lt.s32.totalorder %s32, 0
      %s34 = scalar_select %p33, %s32, 0
      %s35 = smul.u32 2, %s34
      %s37 = ssub.s32 256, 256
      %38 = vsyncadd [#allocation8], %s37
      %s39 = smul.addr %s35, 128
      %s40 = scalar_lea.hbm %s2, %s39
      %s41 = sshll.u32 [#allocation7], 4
      %s42 = int_to_ptr.vmem [resolvable:$true] %s41
      %47 = dma.hbm_to_vmem [thread:$0]  %s40, 256, %s42, [#allocation8], 128, 128, 8
    $region9: #{tpu_custom_call.1} parent=1 // pred_fallthru
      _
    // Predicated region
    $region10: #{tpu_custom_call.1} parent=1 // pred_check
      _
    $region11: #{tpu_custom_call.1} parent=1 // pred_check_branch
      %49 = sbr.rel (0) target = $region13
    $region12: #{tpu_custom_call.1} parent=1 // pred_region
      %50 = dma.done [#allocation5], 256
    $region13: #{tpu_custom_call.1} parent=1 // pred_fallthru
      _
    // Predicated region
    $region14: #{tpu_custom_call.1} parent=1 // pred_check
      _
    $region15: #{tpu_custom_call.1} parent=1 // pred_check_branch
      %52 = sbr.rel (0) target = $region17
    $region16: #{tpu_custom_call.1} parent=1 // pred_region
      %53 = dma.done [#allocation8], 256
    $region17: #{tpu_custom_call.1} parent=1 // pred_fallthru
      _
    %s54 = sadd.s32 0, 0
    %p55 = scmp.lt.s32.totalorder %s54, 0
    %s56 = scalar_select %p55, %s54, 0
    %s57 = smul.u32 2, %s56
    %s58 = sadd.s32 0, 0
    %p59 = scmp.lt.s32.totalorder %s58, 0
    %s60 = scalar_select %p59, %s58, 0
    %s61 = smul.u32 2, %s60
    %p62 = scmp.eq.s32.totalorder 0, 0
    // Predicated region
    $region18: #{tpu_custom_call.1} parent=1 // pred_check
      %p63 = pneg %p62
    $region19: #{tpu_custom_call.1} parent=1 // pred_check_branch
      %65 = sbr.rel (%p63) target = $region21
    $region20: #{tpu_custom_call.1} parent=1 // pred_region
      %66 = vst [vmem:[#allocation9] sm:$0xff] 0.0
    $region21: #{tpu_custom_call.1} parent=1 // pred_fallthru
      _
    %s67 = sld [smem:[#allocation3]]
    %s68 = sadd.s32 0, 0
    %s69 = smul.u32 %s68, 16
    %s70 = sadd.s32 %s69, 16
    %p71 = scmp.le.s32.totalorder %s70, %s67
    // Predicated region
    $region22: #{tpu_custom_call.1} parent=1 // pred_check
      %p72 = pneg %p71
    $region23: #{tpu_custom_call.1} parent=1 // pred_check_branch
      %74 = sbr.rel (%p72) target = $region25
    $region24: #{tpu_custom_call.1} parent=1 // pred_region
      %v75 = vld [vmem:[#allocation7] sm:$0xff]
      %v76 = vld [vmem:[#allocation7 + $0x8] sm:$0xff]
      %v77 = vld [vmem:[#allocation4] sm:$0xff]
      %v78 = vld [vmem:[#allocation4 + $0x8] sm:$0xff]
      %v79 = vsub.f32 %v75, %v77
      %v80 = vsub.f32 %v76, %v78
      %v81 = vrcp.pop %v75
      %v82 = vmul.f32 %v79, %v81
      %v83 = vrcp.pop %v76
      %v84 = vmul.f32 %v80, %v83
      %v85 = vand.u32 2147483647, %v82
      %v86 = vand.u32 2147483647, %v84
      %v87 = vld [vmem:[#allocation9] sm:$0xff]
      %v88 = vadd.f32 %v85, %v86
      %v89 = vadd.f32 %v87, %v88
      %90 = vst [vmem:[#allocation9] sm:$0xff] %v89
    $region25: #{tpu_custom_call.1} parent=1 // pred_fallthru
      _
    %p91 = scmp.lt.s32.totalorder %s69, %s67
    %p92 = scmp.gt.s32.totalorder %s70, %s67
    %p93 = pnand %p91, %p92
    %p94 = pneg %p93
    // Predicated region
    $region26: #{tpu_custom_call.1} parent=1 // pred_check
      _
    $region27: #{tpu_custom_call.1} parent=1 // pred_check_branch
      %96 = sbr.rel (%p93) target = $region29
    $region28: #{tpu_custom_call.1} parent=1 // pred_region
      %v97 = vld [vmem:[#allocation7] sm:$0xff]
      %v98 = vld [vmem:[#allocation7 + $0x8] sm:$0xff]
      %v99 = vld [vmem:[#allocation4] sm:$0xff]
      %v100 = vld [vmem:[#allocation4 + $0x8] sm:$0xff]
      %v101 = vsub.f32 %v97, %v99
      %v102 = vsub.f32 %v98, %v100
      %v103 = vrcp.pop %v97
      %v104 = vmul.f32 %v101, %v103
      %v105 = vrcp.pop %v98
      %v106 = vmul.f32 %v102, %v105
      %v107 = vand.u32 2147483647, %v104
      %v108 = vand.u32 2147483647, %v106
      %v109 = vlaneseq
      %v110 = vshrl.u32 %v109, 7
      %v111 = vadd.s32 %v110, 8
      %v112 = vstv %s69
      %v113 = vadd.s32 %v110, %v112
      %v114 = vadd.s32 %v111, %v112
      %v115 = vstv %s67
      %vm116 = vcmp.lt.s32.totalorder %v113, %v115
      %vm117 = vcmp.lt.s32.totalorder %v114, %v115
      %v118 = vsel %vm116, %v107, 0.0
      %v119 = vsel %vm117, %v108, 0.0
      %v120 = vld [vmem:[#allocation9] sm:$0xff]
      %v121 = vadd.f32 %v118, %v119
      %v122 = vadd.f32 %v120, %v121
      %123 = vst [vmem:[#allocation9] sm:$0xff] %v122
    $region29: #{tpu_custom_call.1} parent=1 // pred_fallthru
      _
    // Predicated region
    $region30: #{tpu_custom_call.1} parent=1 // pred_check
      _
    $region31: #{tpu_custom_call.1} parent=1 // pred_check_branch
      %125 = sbr.rel (0) target = $region33
    $region32: #{tpu_custom_call.1} parent=1 // pred_region
      %s127 = ssub.s32 128, 128
      %128 = vsyncadd [#allocation6], %s127
      %s130 = sshll.u32 [#allocation9], 4
      %s131 = int_to_ptr.vmem [resolvable:$true] %s130
      %133 = dma.vmem_to_hbm [thread:$0]  %s131, 128, %s3, [#allocation6]
    $region33: #{tpu_custom_call.1} parent=1 // pred_fallthru
      _
    // Predicated region
    $region34: #{tpu_custom_call.1} parent=1 // pred_check
      _
    $region35: #{tpu_custom_call.1} parent=1 // pred_check_branch
      %135 = sbr.rel (0) target = $region37
    $region36: #{tpu_custom_call.1} parent=1 // pred_region
      %136 = dma.done [#allocation6], 128
    $region37: #{tpu_custom_call.1} parent=1 // pred_fallthru
      _
    %137 = vsyncpa [#allocation5], 1
    %138 = vsyncpa [#allocation8], 1
    %139 = vsyncpa [#allocation6], 1

</llo_original>
